<compile_context>
chip_gen: v7x
topology: tpu7x:2x2x1
jax: 0.10.0
libtpu: 0.0.40
codegen_flags: <defaults>
</compile_context>

<pallas_src>
import jax
import jax.numpy as jnp
from jax import lax
from jax.experimental import pallas as pl
from jax.experimental.pallas import tpu as pltpu


def _cam_kernel(gamma_ref, x_ref, attn_ref, out_ref, energy_acc, attn_vmem):
    phase = pl.program_id(1)   # 0: accumulate energy, 1: softmax + apply
    k = pl.program_id(2)       # spatial tile index

    # ---------------- phase 0: energy accumulation ----------------
    @pl.when((phase == 0) & (k == 0))
    def _init():
        energy_acc[...] = jnp.zeros_like(energy_acc)

    @pl.when(phase == 0)
    def _accumulate():
        x = x_ref[...]                                   # (C, TN), native dtype
        # energy += X_tile @ X_tile^T : contract the lane (spatial) axis of
        # both operands directly -- no transposed copy in VMEM.
        energy_acc[...] += lax.dot_general(
            x, x,
            dimension_numbers=(((1,), (1,)), ((), ())),
            preferred_element_type=jnp.float32,
        )

    # ------------- phase 1, first tile: softmax of energy -------------
    @pl.when((phase == 1) & (k == 0))
    def _softmax():
        e = energy_acc[...]                              # (C, C) f32
        # softmax(rowmax(E) - E) == exp(rowmin(E) - E) / sum(...):
        # a single cross-lane reduction instead of two.
        m = jnp.min(e, axis=-1, keepdims=True)
        p = jnp.exp(m - e)
        denom = jnp.sum(p, axis=-1, keepdims=True)
        r = pl.reciprocal(denom, approx=True)            # EUP slot (cheap)
        r = r * (2.0 - denom * r)                        # one Newton step -> ~f32 accuracy
        attn = p * r
        attn_ref[...] = attn.astype(attn_ref.dtype)
        attn_vmem[...] = attn.astype(attn_vmem.dtype)    # native dtype for 2nd matmul

    # ------------- phase 1: apply attention per spatial tile -------------
    @pl.when(phase == 1)
    def _apply():
        x = x_ref[...]                                   # (C, TN), native dtype
        ao = jnp.dot(attn_vmem[...], x, preferred_element_type=jnp.float32)
        gamma = gamma_ref[0]
        out_ref[...] = (gamma * ao + x.astype(jnp.float32)).astype(out_ref.dtype)


def _choose_spatial_tile(n, cap=1024):
    """Largest MXU-friendly tile (multiple of 256, then 128) dividing n; else n."""
    for step in (256, 128):
        best = 0
        t = step
        while t <= min(n, cap):
            if n % t == 0:
                best = t
            t += step
        if best:
            return best
    return n  # fall back to a single full-width (lane-dense) tile


def cam_module_forward(x, gamma, *, tn=None):
    """x: (B, C, H, W); gamma: (1,).
    Returns (attention (B, C, C) f32, out (B, C, H, W)) matching the PyTorch module."""
    B, C, H, W = x.shape
    N = H * W
    x_flat = x.reshape(B, C, N)

    if tn is None:
        tn = _choose_spatial_tile(N)
    assert N % tn == 0 and (tn == N or tn % 128 == 0), "invalid spatial tile"
    kt = N // tn

    itemsize = jnp.dtype(x.dtype).itemsize
    cost = pl.CostEstimate(
        flops=4 * B * C * C * N,                 # two C x C x N matmuls per batch
        transcendentals=B * C * C,               # exp of the energy matrix
        bytes_accessed=3 * B * C * N * itemsize  # x read twice + out written once
        + B * C * C * 4 + 4,
    )
    # VMEM footprint estimate: double-buffered x and out tiles, attn output
    # block, plus the two (C, C) scratches; clamp to a safe scoped limit.
    vmem_est = (4 * C * tn * itemsize) + (2 * C * C * 4) + C * C * (4 + itemsize)
    vmem_limit = int(min(max(2 * vmem_est + (1 << 20), 32 << 20), 48 << 20))

    attn, out_flat = pl.pallas_call(
        _cam_kernel,
        out_shape=(
            jax.ShapeDtypeStruct((B, C, C), jnp.float32),
            jax.ShapeDtypeStruct((B, C, N), x.dtype),
        ),
        grid_spec=pltpu.PrefetchScalarGridSpec(
            num_scalar_prefetch=0,
            grid=(B, 2, kt),
            in_specs=[
                pl.BlockSpec(memory_space=pltpu.MemorySpace.SMEM),        # gamma
                pl.BlockSpec((None, C, tn), lambda b, p, k: (b, 0, k)),   # x tiles
            ],
            out_specs=(
                pl.BlockSpec((None, C, C), lambda b, p, k: (b, 0, 0)),    # attention
                # During phase 0 keep pointing at tile 0 (never written there)
                # so no wasted HBM writebacks happen; phase 1 walks the tiles.
                pl.BlockSpec((None, C, tn), lambda b, p, k: (b, 0, k * p)),
            ),
            scratch_shapes=[
                pltpu.VMEM((C, C), jnp.float32),   # energy accumulator
                pltpu.VMEM((C, C), x.dtype),       # attention in native dtype
            ],
        ),
        compiler_params=pltpu.CompilerParams(
            dimension_semantics=("parallel", "arbitrary", "arbitrary"),
            vmem_limit_bytes=vmem_limit,
        ),
        cost_estimate=cost,
    )(gamma, x_flat)

    return attn, out_flat.reshape(B, C, H, W)


def cam_module_reference(x, gamma):
    """Pure-JAX reference mirroring the PyTorch forward exactly."""
    B, C, H, W = x.shape
    xf = x.reshape(B, C, -1)
    energy = jnp.einsum('bcn,bdn->bcd', xf, xf)
    energy_new = jnp.max(energy, axis=-1, keepdims=True) - energy
    attn = jax.nn.softmax(energy_new, axis=-1)
    out = jnp.einsum('bcd,bdn->bcn', attn, xf).reshape(B, C, H, W)
    out = gamma[0] * out + x
    return attn, out


def _check(x, gamma, tn=None, atol=1e-4, rtol=1e-4):
    # Tolerance note: the kernel uses the mathematically-identical
    # exp(rowmin(E) - E) softmax and MXU matmuls; tiny rounding-order
    # differences vs the XLA einsum reference on O(||x||^2) energies are
    # expected, hence 1e-4 rather than machine-eps tolerances.
    attn, out = cam_module_forward(x, gamma, tn=tn)
    jax.block_until_ready((attn, out))
    attn_ref, out_ref = cam_module_reference(x, gamma)
    assert jnp.allclose(attn, attn_ref, atol=atol, rtol=rtol), "attention mismatch"
    assert jnp.allclose(out, out_ref, atol=atol, rtol=rtol), "output mismatch"


if __name__ == "__main__":
    key = jax.random.PRNGKey(0)
    k1, k2 = jax.random.split(key)

    # Case 1: requested toy shape; tn=128 forces the multi-tile (accumulating)
    # path (N = 256 -> 2 spatial tiles). gamma is initialized to 0 in the
    # module; we use a nonzero value so the attention branch is exercised.
    x1 = jax.random.normal(k1, (2, 4, 16, 16), dtype=jnp.float32)
    _check(x1, jnp.array([0.5], dtype=jnp.float32), tn=128)

    # Case 2: spatial size not a multiple of 128 -> single full-width tile path.
    x2 = jax.random.normal(k2, (1, 8, 12, 12), dtype=jnp.float32)
    _check(x2, jnp.array([0.25], dtype=jnp.float32))

    print("KERNEL_OK")
</pallas_src>

<mosaic_0001>
module attributes {stable_mosaic.version = 11 : i64} {
  func.func @_cam_kernel(%arg0: i32, %arg1: i32, %arg2: i32, %arg3: memref<1xf32, #tpu.memory_space<smem>>, %arg4: memref<1x4x128xf32, #tpu.memory_space<vmem>>, %arg5: memref<1x4x4xf32, #tpu.memory_space<vmem>>, %arg6: memref<1x4x128xf32, #tpu.memory_space<vmem>>, %arg7: memref<4x4xf32, #tpu.memory_space<vmem>>, %arg8: memref<4x4xf32, #tpu.memory_space<vmem>>) attributes {dimension_semantics = [#tpu.dimension_semantics<parallel>, #tpu.dimension_semantics<arbitrary>, #tpu.dimension_semantics<arbitrary>], iteration_bounds = array<i64: 2, 2, 2>, scalar_prefetch = 0 : i64, scratch_operands = 2 : i64, tpu.core_type = #tpu.core_type<tc>, window_params = [{transform_indices = @transform_0, window_bounds = array<i64: 1>}, {transform_indices = @transform_1, window_bounds = array<i64: 1, 4, 128>}, {transform_indices = @transform_2, window_bounds = array<i64: 1, 4, 4>}, {transform_indices = @transform_3, window_bounds = array<i64: 1, 4, 128>}]} {
    %c0_i32 = arith.constant 0 : i32
    %0 = arith.cmpi eq, %arg1, %c0_i32 : i32
    %c0_i32_0 = arith.constant 0 : i32
    %1 = arith.cmpi eq, %arg2, %c0_i32_0 : i32
    %2 = arith.andi %0, %1 : i1
    %3 = arith.extui %2 : i1 to i32
    %c0_i32_1 = arith.constant 0 : i32
    %4 = arith.cmpi ne, %3, %c0_i32_1 : i32
    scf.if %4 {
      %cst = arith.constant 0.000000e+00 : f32
      %16 = vector.broadcast %cst : f32 to vector<4x4xf32>
      %c0 = arith.constant 0 : index
      %c0_8 = arith.constant 0 : index
      %17 = vector.load %arg7[%c0, %c0_8] : memref<4x4xf32, #tpu.memory_space<vmem>>, vector<4x4xf32>
      tpu.vector_store %arg7[%c0, %c0_8], %16 {strides = array<i32>} : memref<4x4xf32, #tpu.memory_space<vmem>>, vector<4x4xf32>,
    } else {
    }
    %c0_i32_2 = arith.constant 0 : i32
    %5 = arith.cmpi eq, %arg1, %c0_i32_2 : i32
    %6 = arith.extui %5 : i1 to i32
    %c0_i32_3 = arith.constant 0 : i32
    %7 = arith.cmpi ne, %6, %c0_i32_3 : i32
    scf.if %7 {
      %c0 = arith.constant 0 : index
      %c0_8 = arith.constant 0 : index
      %c0_9 = arith.constant 0 : index
      %16 = vector.load %arg4[%c0, %c0_8, %c0_9] : memref<1x4x128xf32, #tpu.memory_space<vmem>>, vector<1x4x128xf32>
      %17 = vector.shape_cast %16 : vector<1x4x128xf32> to vector<4x128xf32>
      %c0_10 = arith.constant 0 : index
      %c0_11 = arith.constant 0 : index
      %18 = vector.load %arg7[%c0_10, %c0_11] : memref<4x4xf32, #tpu.memory_space<vmem>>, vector<4x4xf32>
      %cst = arith.constant dense<0.000000e+00> : vector<4x4xf32>
      %19 = tpu.matmul %17, %17, %cst {dimension_numbers = #tpu.dot_dimension_numbers<[1], [1], [0], [0], [0, 0, 1, 0], [], []>} : vector<4x128xf32>, vector<4x128xf32>, vector<4x4xf32> -> vector<4x4xf32>
      %20 = arith.addf %18, %19 : vector<4x4xf32>
      %c0_12 = arith.constant 0 : index
      %c0_13 = arith.constant 0 : index
      %21 = vector.load %arg7[%c0_12, %c0_13] : memref<4x4xf32, #tpu.memory_space<vmem>>, vector<4x4xf32>
      tpu.vector_store %arg7[%c0_12, %c0_13], %20 {strides = array<i32>} : memref<4x4xf32, #tpu.memory_space<vmem>>, vector<4x4xf32>,
    } else {
    }
    %c1_i32 = arith.constant 1 : i32
    %8 = arith.cmpi eq, %arg1, %c1_i32 : i32
    %c0_i32_4 = arith.constant 0 : i32
    %9 = arith.cmpi eq, %arg2, %c0_i32_4 : i32
    %10 = arith.andi %8, %9 : i1
    %11 = arith.extui %10 : i1 to i32
    %c0_i32_5 = arith.constant 0 : i32
    %12 = arith.cmpi ne, %11, %c0_i32_5 : i32
    scf.if %12 {
      %c0 = arith.constant 0 : index
      %c0_8 = arith.constant 0 : index
      %16 = vector.load %arg7[%c0, %c0_8] : memref<4x4xf32, #tpu.memory_space<vmem>>, vector<4x4xf32>
      %cst = arith.constant dense<0x7F800000> : vector<4xf32>
      %17 = vector.multi_reduction <minimumf>, %16, %cst [1] : vector<4x4xf32> to vector<4xf32>
      %18 = vector.shape_cast %17 : vector<4xf32> to vector<4x1xf32>
      %19 = vector.broadcast %18 : vector<4x1xf32> to vector<4x4xf32>
      %20 = arith.subf %19, %16 : vector<4x4xf32>
      %21 = math.exp %20 : vector<4x4xf32>
      %cst_9 = arith.constant dense<0.000000e+00> : vector<4xf32>
      %22 = vector.multi_reduction <add>, %21, %cst_9 [1] : vector<4x4xf32> to vector<4xf32>
      %23 = vector.shape_cast %22 : vector<4xf32> to vector<4x1xf32>
      %24 = tpu.reciprocal %23 {approx = true} : vector<4x1xf32> -> vector<4x1xf32>
      %25 = arith.mulf %23, %24 : vector<4x1xf32>
      %cst_10 = arith.constant 2.000000e+00 : f32
      %26 = vector.broadcast %cst_10 : f32 to vector<4x1xf32>
      %27 = arith.subf %26, %25 : vector<4x1xf32>
      %28 = arith.mulf %24, %27 : vector<4x1xf32>
      %29 = vector.broadcast %28 : vector<4x1xf32> to vector<4x4xf32>
      %30 = arith.mulf %21, %29 : vector<4x4xf32>
      %c0_11 = arith.constant 0 : index
      %c0_12 = arith.constant 0 : index
      %c0_13 = arith.constant 0 : index
      %31 = vector.load %arg5[%c0_11, %c0_12, %c0_13] : memref<1x4x4xf32, #tpu.memory_space<vmem>>, vector<1x4x4xf32>
      %32 = vector.shape_cast %31 : vector<1x4x4xf32> to vector<4x4xf32>
      %33 = vector.shape_cast %30 : vector<4x4xf32> to vector<1x4x4xf32>
      tpu.vector_store %arg5[%c0_11, %c0_12, %c0_13], %33 {strides = array<i32>} : memref<1x4x4xf32, #tpu.memory_space<vmem>>, vector<1x4x4xf32>,
      %c0_14 = arith.constant 0 : index
      %c0_15 = arith.constant 0 : index
      %34 = vector.load %arg8[%c0_14, %c0_15] : memref<4x4xf32, #tpu.memory_space<vmem>>, vector<4x4xf32>
      tpu.vector_store %arg8[%c0_14, %c0_15], %30 {strides = array<i32>} : memref<4x4xf32, #tpu.memory_space<vmem>>, vector<4x4xf32>,
    } else {
    }
    %c1_i32_6 = arith.constant 1 : i32
    %13 = arith.cmpi eq, %arg1, %c1_i32_6 : i32
    %14 = arith.extui %13 : i1 to i32
    %c0_i32_7 = arith.constant 0 : i32
    %15 = arith.cmpi ne, %14, %c0_i32_7 : i32
    scf.if %15 {
      %c0 = arith.constant 0 : index
      %c0_8 = arith.constant 0 : index
      %c0_9 = arith.constant 0 : index
      %16 = vector.load %arg4[%c0, %c0_8, %c0_9] : memref<1x4x128xf32, #tpu.memory_space<vmem>>, vector<1x4x128xf32>
      %17 = vector.shape_cast %16 : vector<1x4x128xf32> to vector<4x128xf32>
      %c0_10 = arith.constant 0 : index
      %c0_11 = arith.constant 0 : index
      %18 = vector.load %arg8[%c0_10, %c0_11] : memref<4x4xf32, #tpu.memory_space<vmem>>, vector<4x4xf32>
      %cst = arith.constant dense<0.000000e+00> : vector<4x128xf32>
      %19 = tpu.matmul %18, %17, %cst {dimension_numbers = #tpu.dot_dimension_numbers<[1], [0], [0], [1], [0, 0, 1, 1], [], []>} : vector<4x4xf32>, vector<4x128xf32>, vector<4x128xf32> -> vector<4x128xf32>
      %c0_12 = arith.constant 0 : index
      %20 = memref.load %arg3[%c0_12] : memref<1xf32, #tpu.memory_space<smem>>
      %21 = vector.broadcast %20 : f32 to vector<4x128xf32>
      %22 = arith.mulf %21, %19 : vector<4x128xf32>
      %23 = arith.addf %22, %17 : vector<4x128xf32>
      %c0_13 = arith.constant 0 : index
      %c0_14 = arith.constant 0 : index
      %c0_15 = arith.constant 0 : index
      %24 = vector.load %arg6[%c0_13, %c0_14, %c0_15] : memref<1x4x128xf32, #tpu.memory_space<vmem>>, vector<1x4x128xf32>
      %25 = vector.shape_cast %24 : vector<1x4x128xf32> to vector<4x128xf32>
      %26 = vector.shape_cast %23 : vector<4x128xf32> to vector<1x4x128xf32>
      tpu.vector_store %arg6[%c0_13, %c0_14, %c0_15], %26 {strides = array<i32>} : memref<1x4x128xf32, #tpu.memory_space<vmem>>, vector<1x4x128xf32>,
    } else {
    }
    return
  }
  func.func @transform_0(%arg0: i32, %arg1: i32, %arg2: i32) -> i32 {
    %c0_i32 = arith.constant 0 : i32
    %c0_i32_0 = arith.constant 0 : i32
    return %c0_i32 : i32
  }
  func.func @transform_1(%arg0: i32, %arg1: i32, %arg2: i32) -> (i32, i32, i32) {
    %c0_i32 = arith.constant 0 : i32
    %c0_i32_0 = arith.constant 0 : i32
    return %arg0, %c0_i32, %arg2 : i32, i32, i32
  }
  func.func @transform_2(%arg0: i32, %arg1: i32, %arg2: i32) -> (i32, i32, i32) {
    %c0_i32 = arith.constant 0 : i32
    %c0_i32_0 = arith.constant 0 : i32
    %c0_i32_1 = arith.constant 0 : i32
    return %arg0, %c0_i32, %c0_i32_0 : i32, i32, i32
  }
  func.func @transform_3(%arg0: i32, %arg1: i32, %arg2: i32) -> (i32, i32, i32) {
    %0 = arith.muli %arg2, %arg1 : i32
    %c0_i32 = arith.constant 0 : i32
    %c0_i32_0 = arith.constant 0 : i32
    return %arg0, %c0_i32, %0 : i32, i32, i32
  }
}

</mosaic_0001>

<llo_original>
// kernel: tpu_custom_call.1
$region0: #{tpu_custom_call.1}
  #allocation0 [shape = 'u32[]', space=smem, size = 0x4, offset = 0x4, fixed_abs, tag = 'smem constant byte address 0x4 - core index']
  #allocation1 [shape = 'u32[144,128]{1,0:T(1,128)}', space=vmem, size = 0x12000, scoped, tag = 'internal scratch']
  #allocation2 [shape = 'f32[4,4]{1,0:T(4,128)}', space=vmem, size = 0x800, scoped, tag = 'scratch operand']
  #allocation3 [shape = 'f32[4,4]{1,0:T(4,128)}', space=vmem, size = 0x800, scoped, tag = 'scratch operand']
  #allocation4 [shape = 'f32[1]{0:T(128)S(6)}', space=smem, size = 0x200, scoped, tag = 'scoped memory for tpu_custom_call.1']
  %s0 = inlined_call_operand.<no memory space> [shape: f32[1], index: 0, kind: input, shape index: {}]
  %s1 = inlined_call_operand.hbm [shape: f32[2,4,256], index: 1, kind: input, shape index: {}]
  %s2 = inlined_call_operand.hbm [shape: f32[2,4,4], index: 2, kind: output, shape index: {0}]
  %s3 = inlined_call_operand.hbm [shape: f32[2,4,256], index: 3, kind: output, shape index: {1}]
  %4 = xla_tuple %s2, %s3
  %s5 = sld [smem:[#allocation0]]
  $region69: #{tpu_custom_call.1} parent=0
    _
  %s7 = ssub.s32 1, %s5
  %s8 = scalar_select 0, %s7, %s5
  %9 = sst [smem:[#allocation4]] %s0
  $region1: #{tpu_custom_call.1} parent=0
    #allocation5 [shape = 'u8[4096]{0}', space=vmem, size = 0x1000, scoped, tag = 'input window, operand 1']
    #allocation6 [shape = 's32[2]{0}', space=sflag, size = 0x8, scoped, tag = 'scoped memory for tpu_custom_call.1']
    #allocation7 [shape = 's32[2]{0}', space=sflag, size = 0x8, scoped, tag = 'scoped memory for tpu_custom_call.1']
    #allocation8 [shape = 'u8[4096]{0}', space=vmem, size = 0x1000, scoped, tag = 'output window, operand 0']
    #allocation9 [shape = 'u8[4096]{0}', space=vmem, size = 0x1000, scoped, tag = 'output window, operand 1']
    #allocation10 [shape = 's32[2]{0}', space=sflag, size = 0x8, scoped, tag = 'scoped memory for tpu_custom_call.1']
    %10 = vsyncpa [#allocation6], 0
    %s11 = scalar_lea.sflag [#allocation6], 1
    %12 = vsyncpa %s11, 0
    %13 = vsyncpa [#allocation7], 0
    %s14 = scalar_lea.sflag [#allocation7], 1
    %15 = vsyncpa %s14, 0
    %16 = vsyncpa [#allocation10], 0
    %s17 = scalar_lea.sflag [#allocation10], 1
    %18 = vsyncpa %s17, 0
    loop: start=0, step=1, limit=10
    $region2: #{tpu_custom_call.1} parent=1 // loop_pre_header
      _
    $region3: #{tpu_custom_call.1} parent=1 // loop_header
      %s20 = sphi 0, %s24
      %p21 = scmp.ge.s32.totalorder %s20, 10
      %s27 = sphi 0, %s46
      %s28 = sphi 0, %s42
      %s29 = sphi 0, %s38
      %s30 = sphi 0, %s27
      %s31 = sphi 0, %s28
      %s32 = sphi 0, %s29
      %s33 = sphi 0, %s30
      %s34 = sphi 0, %s31
      %s35 = sphi 0, %s32
      %s47 = sphi 0, %s47
      %s49 = sphi 0, %s47
      %s50 = sphi 0, %s49
      %s64 = sphi 0, %s50
      %s72 = sphi 0, %s74
      %s75 = sphi 0, %s72
      %s76 = sphi 0, %s75
      %s92 = sphi 0, %s76
      %s98 = sphi 0, %s100
      %s101 = sphi 0, %s98
      %s102 = sphi 0, %s101
      %s118 = sphi 0, %s102
      %s128 = sphi 0, %s130
      %s131 = sphi 0, %s128
      %s132 = sphi 0, %s131
      %s148 = sphi 0, %s132
    $region4: #{tpu_custom_call.1} parent=1 // loop_header_branch
      %23 = sbr.rel (%p21) target = $region8
    $region5: #{tpu_custom_call.1} parent=1 // loop_body
      %s25 = ssub.s32 %s20, 1
      %s26 = ssub.s32 %s20, 2
      %s36 = sadd.s32 1, %s29
      %p37 = scmp.ge.s32.totalorder %s36, 2
      %s38 = scalar_select %p37, 0, %s36
      %s39 = sadd.s32 1, %s28
      %s40 = scalar_select %p37, %s39, %s28
      %p41 = scmp.ge.s32.totalorder %s40, 2
      %s42 = scalar_select %p41, 0, %s40
      %s43 = sadd.s32 1, %s27
      %s44 = scalar_select %p41, %s43, %s27
      %p45 = scmp.ge.s32.totalorder %s44, 2
      %s46 = scalar_select %p45, 0, %s44
      %s48 = sadd.s32 %s47, 1
      %p51 = scmp.eq.s32.totalorder %s20, 7
      %p52 = scmp.ne.s32.totalorder %s47, %s49
      %p53 = scmp.eq.s32.totalorder %s20, 0
      %p54 = por %p52, %p53
      %p55 = scmp.ne.s32.totalorder %s47, %s49
      %p56 = scmp.eq.s32.totalorder %s25, 7
      %p57 = por %p55, %p56
      %p58 = scmp.ne.s32.totalorder %s49, %s50
      %p59 = scmp.eq.s32.totalorder %s25, 0
      %p60 = por %p58, %p59
      %p61 = scmp.ne.s32.totalorder %s49, %s50
      %p62 = scmp.eq.s32.totalorder %s26, 7
      %p63 = por %p61, %p62
      %p65 = scmp.ne.s32.totalorder %s50, %s64
      %p66 = scmp.eq.s32.totalorder %s26, 0
      %p67 = por %p65, %p66
      %s68 = ssub.s32 %s27, %s46
      %s69 = ssub.s32 %s29, %s38
      %s70 = sor.u32 %s68, %s69
      %p71 = scmp.eq.s32.totalorder %s70, 0
      %s73 = sadd.s32 %s72, 1
      %s74 = scalar_select %p71, %s72, %s73
      %p77 = pneg %p71
      %p78 = scmp.eq.s32.totalorder %s20, 7
      %p79 = por %p77, %p78
      %p80 = scmp.ne.s32.totalorder %s72, %s75
      %p81 = scmp.eq.s32.totalorder %s20, 0
      %p82 = por %p80, %p81
      %p83 = scmp.ne.s32.totalorder %s72, %s75
      %p84 = scmp.eq.s32.totalorder %s25, 7
      %p85 = por %p83, %p84
      %p86 = scmp.ne.s32.totalorder %s75, %s76
      %p87 = scmp.eq.s32.totalorder %s25, 0
      %p88 = por %p86, %p87
      %p89 = scmp.ne.s32.totalorder %s75, %s76
      %p90 = scmp.eq.s32.totalorder %s26, 7
      %p91 = por %p89, %p90
      %p93 = scmp.ne.s32.totalorder %s76, %s92
      %p94 = scmp.eq.s32.totalorder %s26, 0
      %p95 = por %p93, %p94
      %s96 = ssub.s32 %s27, %s46
      %p97 = scmp.eq.s32.totalorder %s96, 0
      %s99 = sadd.s32 %s98, 1
      %s100 = scalar_select %p97, %s98, %s99
      %p103 = pneg %p97
      %p104 = scmp.eq.s32.totalorder %s20, 7
      %p105 = por %p103, %p104
      %p106 = scmp.ne.s32.totalorder %s98, %s101
      %p107 = scmp.eq.s32.totalorder %s20, 0
      %p108 = por %p106, %p107
      %p109 = scmp.ne.s32.totalorder %s98, %s101
      %p110 = scmp.eq.s32.totalorder %s25, 7
      %p111 = por %p109, %p110
      %p112 = scmp.ne.s32.totalorder %s101, %s102
      %p113 = scmp.eq.s32.totalorder %s25, 0
      %p114 = por %p112, %p113
      %p115 = scmp.ne.s32.totalorder %s101, %s102
      %p116 = scmp.eq.s32.totalorder %s26, 7
      %p117 = por %p115, %p116
      %p119 = scmp.ne.s32.totalorder %s102, %s118
      %p120 = scmp.eq.s32.totalorder %s26, 0
      %p121 = por %p119, %p120
      %s122 = smul.u32 %s29, %s28
      %s123 = smul.u32 %s38, %s42
      %s124 = ssub.s32 %s27, %s46
      %s125 = ssub.s32 %s122, %s123
      %s126 = sor.u32 %s124, %s125
      %p127 = scmp.eq.s32.totalorder %s126, 0
      %s129 = sadd.s32 %s128, 1
      %s130 = scalar_select %p127, %s128, %s129
      %p133 = pneg %p127
      %p134 = scmp.eq.s32.totalorder %s20, 7
      %p135 = por %p133, %p134
      %p136 = scmp.ne.s32.totalorder %s128, %s131
      %p137 = scmp.eq.s32.totalorder %s20, 0
      %p138 = por %p136, %p137
      %p139 = scmp.ne.s32.totalorder %s128, %s131
      %p140 = scmp.eq.s32.totalorder %s25, 7
      %p141 = por %p139, %p140
      %p142 = scmp.ne.s32.totalorder %s131, %s132
      %p143 = scmp.eq.s32.totalorder %s25, 0
      %p144 = por %p142, %p143
      %p145 = scmp.ne.s32.totalorder %s131, %s132
      %p146 = scmp.eq.s32.totalorder %s26, 7
      %p147 = por %p145, %p146
      %p149 = scmp.ne.s32.totalorder %s132, %s148
      %p150 = scmp.eq.s32.totalorder %s26, 0
      %p151 = por %p149, %p150
      %p152 = scmp.le.s32.totalorder 1, %s20
      %p153 = scmp.lt.s32.totalorder %s20, 9
      %p154 = pnand %p152, %p153
      %p155 = pneg %p154
      // Predicated region
      $region9: #{tpu_custom_call.1} parent=5 // pred_check
        _
      $region10: #{tpu_custom_call.1} parent=5 // pred_check_branch
        %157 = sbr.rel (%p154) target = $region12
      $region11: #{tpu_custom_call.1} parent=5 // pred_region
        %s158 = ssub.s32 %s20, 1
        // Predicated region
        $region13: #{tpu_custom_call.1} parent=11 // pred_check
          %p159 = pneg %p60
        $region14: #{tpu_custom_call.1} parent=11 // pred_check_branch
          %161 = sbr.rel (%p159) target = $region16
        $region15: #{tpu_custom_call.1} parent=11 // pred_region
          _
        $region16: #{tpu_custom_call.1} parent=11 // pred_fallthru
          _
      $region12: #{tpu_custom_call.1} parent=5 // pred_fallthru
        _
      %p162 = scmp.lt.s32.totalorder %s20, 8
      // Predicated region
      $region17: #{tpu_custom_call.1} parent=5 // pred_check
        %p163 = pneg %p162
      $region18: #{tpu_custom_call.1} parent=5 // pred_check_branch
        %165 = sbr.rel (%p163) target = $region20
      $region19: #{tpu_custom_call.1} parent=5 // pred_region
        // Predicated region
        $region21: #{tpu_custom_call.1} parent=19 // pred_check
          %p166 = pneg %p82
        $region22: #{tpu_custom_call.1} parent=19 // pred_check_branch
          %168 = sbr.rel (%p166) target = $region24
        $region23: #{tpu_custom_call.1} parent=19 // pred_region
          %s169 = sand.u32 %s72, 1
          %s170 = scalar_lea.sflag [#allocation6], %s169
          %s171 = sand.u32 %s72, 1
          %s172 = smul.addr %s171, 4
          %s173 = scalar_lea.vmem [#allocation5], %s172
          %s175 = ssub.s32 64, 64
          %176 = vsyncadd %s170, %s175
          %s177 = smul.addr %s27, 2
          %s178 = sadd.s32 %s29, %s177
          %s179 = smul.addr %s178, 64
          %s180 = scalar_lea.hbm %s1, %s179
          %s182 = sshll.u32 %s173, 4
          %s183 = int_to_ptr.vmem [resolvable:$true] %s182
          %185 = dma.hbm_to_vmem [thread:$0]  %s180, 64, %s183, %s170
        $region24: #{tpu_custom_call.1} parent=19 // pred_fallthru
          _
      $region20: #{tpu_custom_call.1} parent=5 // pred_fallthru
        _
      %p186 = scmp.le.s32.totalorder 1, %s20
      %p187 = scmp.lt.s32.totalorder %s20, 9
      %p188 = pnand %p186, %p187
      %p189 = pneg %p188
      // Predicated region
      $region25: #{tpu_custom_call.1} parent=5 // pred_check
        _
      $region26: #{tpu_custom_call.1} parent=5 // pred_check_branch
        %191 = sbr.rel (%p188) target = $region28
      $region27: #{tpu_custom_call.1} parent=5 // pred_region
        %s192 = ssub.s32 %s20, 1
        %s193 = sand.u32 %s75, 1
        %s194 = scalar_lea.sflag [#allocation6], %s193
        %s195 = sand.u32 %s75, 1
        %s196 = smul.addr %s195, 4
        %s197 = scalar_lea.vmem [#allocation5], %s196
        // Predicated region
        $region29: #{tpu_custom_call.1} parent=27 // pred_check
          %p198 = pneg %p88
        $region30: #{tpu_custom_call.1} parent=27 // pred_check_branch
          %200 = sbr.rel (%p198) target = $region32
        $region31: #{tpu_custom_call.1} parent=27 // pred_region
          %201 = dma.done %s194, 64
        $region32: #{tpu_custom_call.1} parent=27 // pred_fallthru
          _
        %p202 = pneg %p60
        %p203 = pneg %p57
        %s204 = sand.u32 %s75, 1
        %s205 = scalar_lea.sflag [#allocation6], %s204
        %s206 = sand.u32 %s75, 1
        %s207 = smul.addr %s206, 4
        %s208 = scalar_lea.vmem [#allocation5], %s207
        %p209 = pneg %p88
        %p210 = pneg %p85
        %p211 = pneg %p114
        %p212 = pneg %p111
        %s213 = sand.u32 %s101, 1
        %s214 = scalar_lea.sflag [#allocation7], %s213
        %s215 = sand.u32 %s101, 1
        %s216 = smul.addr %s215, 4
        %s217 = scalar_lea.vmem [#allocation8], %s216
        %p218 = pneg %p144
        %p219 = pneg %p141
        %s220 = sand.u32 %s131, 1
        %s221 = scalar_lea.sflag [#allocation10], %s220
        %s222 = sand.u32 %s131, 1
        %s223 = smul.addr %s222, 4
        %s224 = scalar_lea.vmem [#allocation9], %s223
        %s225 = smul.u32 %s32, %s31
        %p226 = scmp.eq.s32.totalorder %s31, 0
        %p227 = scmp.eq.s32.totalorder %s32, 0
        %p228 = pnand %p226, %p227
        %p229 = pneg %p228
        // Predicated region
        $region33: #{tpu_custom_call.1} parent=27 // pred_check
          _
        $region34: #{tpu_custom_call.1} parent=27 // pred_check_branch
          %231 = sbr.rel (%p228) target = $region36
        $region35: #{tpu_custom_call.1} parent=27 // pred_region
          %vm232 = vcmask 27648
          %233 = vst.msk [vmem:[#allocation2] sm:$0xf] %vm232, 0.0
        $region36: #{tpu_custom_call.1} parent=27 // pred_fallthru
          _
        // Predicated region
        $region37: #{tpu_custom_call.1} parent=27 // pred_check
          %p234 = pneg %p226
        $region38: #{tpu_custom_call.1} parent=27 // pred_check_branch
          %236 = sbr.rel (%p234) target = $region40
        $region39: #{tpu_custom_call.1} parent=27 // pred_region
          %v237 = vld [vmem:[%s197] sm:$0xf]
          %v238 = vld [vmem:[#allocation2] sm:$0xf]
          %239 = vmatprep.subr.mxu0 0.0
          %240 = vmatpush1.xpose.msra.mxu0 %v237
          %241 = vmatprep.subr.mxu0 0.0
          %242 = vmatpush1.xpose.msra.mxu0 0.0
          %243 = vmatprep.subr.mxu0 0.0
          %244 = vmatpush1.xpose.msra.mxu0 0.0
          %245 = vmatprep.subr.mxu0 0.0
          %246 = vmatpush1.xpose.msra.mxu0 0.0
          %247 = vmatprep.subr.mxu0 0.0
          %248 = vmatpush1.xpose.msra.mxu0 0.0
          %249 = vmatprep.subr.mxu0 0.0
          %250 = vmatpush1.xpose.msra.mxu0 0.0
          %251 = vmatprep.subr.mxu0 0.0
          %252 = vmatpush1.xpose.msra.mxu0 0.0
          %253 = vmatprep.subr.mxu0 0.0
          %254 = vmatpush1.xpose.msra.mxu0 0.0
          %255 = vmatprep.subr.mxu0 0.0
          %256 = vmatpush1.xpose.msra.mxu0 0.0
          %257 = vmatprep.subr.mxu0 0.0
          %258 = vmatpush1.xpose.msra.mxu0 0.0
          %259 = vmatprep.subr.mxu0 0.0
          %260 = vmatpush1.xpose.msra.mxu0 0.0
          %261 = vmatprep.subr.mxu0 0.0
          %262 = vmatpush1.xpose.msra.mxu0 0.0
          %263 = vmatprep.subr.mxu0 0.0
          %264 = vmatpush1.xpose.msra.mxu0 0.0
          %265 = vmatprep.subr.mxu0 0.0
          %266 = vmatpush1.xpose.msra.mxu0 0.0
          %267 = vmatprep.subr.mxu0 0.0
          %268 = vmatpush1.xpose.msra.mxu0 0.0
          %269 = vmatprep.subr.mxu0 0.0
          %270 = vmatpush1.xpose.msra.mxu0 0.0
          %271 = vmatprep.subr.mxu0 0.0
          %272 = vmatpush1.xpose.msra.mxu0 0.0
          %273 = vmatprep.subr.mxu0 0.0
          %274 = vmatpush1.xpose.msra.mxu0 0.0
          %275 = vmatprep.subr.mxu0 0.0
          %276 = vmatpush1.xpose.msra.mxu0 0.0
          %277 = vmatprep.subr.mxu0 0.0
          %278 = vmatpush1.xpose.msra.mxu0 0.0
          %279 = vmatprep.subr.mxu0 0.0
          %280 = vmatpush1.xpose.msra.mxu0 0.0
          %281 = vmatprep.subr.mxu0 0.0
          %282 = vmatpush1.xpose.msra.mxu0 0.0
          %283 = vmatprep.subr.mxu0 0.0
          %284 = vmatpush1.xpose.msra.mxu0 0.0
          %285 = vmatprep.subr.mxu0 0.0
          %286 = vmatpush1.xpose.msra.mxu0 0.0
          %287 = vmatprep.subr.mxu0 0.0
          %288 = vmatpush1.xpose.msra.mxu0 0.0
          %289 = vmatprep.subr.mxu0 0.0
          %290 = vmatpush1.xpose.msra.mxu0 0.0
          %291 = vmatprep.subr.mxu0 0.0
          %292 = vmatpush1.xpose.msra.mxu0 0.0
          %293 = vmatprep.subr.mxu0 0.0
          %294 = vmatpush1.xpose.msra.mxu0 0.0
          %295 = vmatprep.subr.mxu0 0.0
          %296 = vmatpush1.xpose.msra.mxu0 0.0
          %297 = vmatprep.subr.mxu0 0.0
          %298 = vmatpush1.xpose.msra.mxu0 0.0
          %299 = vmatprep.subr.mxu0 0.0
          %300 = vmatpush1.xpose.msra.mxu0 0.0
          %301 = vmatprep.subr.mxu0 0.0
          %302 = vmatpush1.xpose.msra.mxu0 0.0
          %303 = vmatprep.mubr.f32.mxu0 0.0
          %304 = vmatmul.mubr.f32.gmra.mrb[0].mxu0 %v237
          %v305 = vpop.f32.mrb[0].mxu0
          %v306 = vadd.f32 0.0, %v305
          %v307 = vpop.f32.mrb[0].mxu0
          %308 = vdwg.mxu0
          %v309 = vadd.f32 %v238, %v306
          %vm310 = vcmask 27648
          %311 = vst.msk [vmem:[#allocation2] sm:$0xf] %vm310, %v309
        $region40: #{tpu_custom_call.1} parent=27 // pred_fallthru
          _
        %p312 = scmp.eq.s32.totalorder %s31, 1
        %p313 = pnand %p312, %p227
        %p314 = pneg %p313
        // Predicated region
        $region41: #{tpu_custom_call.1} parent=27 // pred_check
          _
        $region42: #{tpu_custom_call.1} parent=27 // pred_check_branch
          %316 = sbr.rel (%p313) target = $region44
        $region43: #{tpu_custom_call.1} parent=27 // pred_region
          %v317 = vld [vmem:[#allocation2] sm:$0xf]
          %vm318 = vcmask 27648
          %v319 = vsel %vm318, %v317, inf
          %320 = vmin.xlane.f32.xlu0 %v319
          %v321 = vpop.xlane.xlu0 %320
          %v322 = vsub.f32 %v321, %v317
          %v323 = vmul.f32 %v322, 1.442695
          %v324 = vpow.pop %v323
          %v325 = vsel %vm318, %v324, 0.0
          %326 = vadd.xlane.f32.xlu0 %v325
          %v327 = vpop.xlane.xlu0 %326
          %v328 = vrcp.pop %v327
          %v329 = vmul.f32 %v327, %v328
          %v330 = vsub.f32 2.0, %v329
          %v331 = vmul.f32 %v328, %v330
          %v332 = vmul.f32 %v324, %v331
          %333 = vst.msk [vmem:[%s217] sm:$0xf] %vm318, %v332
          %334 = vst.msk [vmem:[#allocation3] sm:$0xf] %vm318, %v332
        $region44: #{tpu_custom_call.1} parent=27 // pred_fallthru
          _
        // Predicated region
        $region45: #{tpu_custom_call.1} parent=27 // pred_check
          %p335 = pneg %p312
        $region46: #{tpu_custom_call.1} parent=27 // pred_check_branch
          %337 = sbr.rel (%p335) target = $region48
        $region47: #{tpu_custom_call.1} parent=27 // pred_region
          %v338 = vld [vmem:[%s197] sm:$0xf]
          %v339 = vld [vmem:[#allocation3] sm:$0xf]
          %vm340 = vcmask 31744
          %v342 = vsel %vm340, %v339, 0
          %vm344 = vcmask 1043456
          %v346 = vsel %vm344, %v338, 0
          %348 = vmatprep.subr.mxu0 0.0
          %349 = vmatpush1.msra.mxu0 %v346
          %350 = vmatprep.subr.mxu0 0.0
          %351 = vmatpush1.msra.mxu0 0.0
          %352 = vmatprep.subr.mxu0 0.0
          %353 = vmatpush1.msra.mxu0 0.0
          %354 = vmatprep.subr.mxu0 0.0
          %355 = vmatpush1.msra.mxu0 0.0
          %356 = vmatprep.subr.mxu0 0.0
          %357 = vmatpush1.msra.mxu0 0.0
          %358 = vmatprep.subr.mxu0 0.0
          %359 = vmatpush1.msra.mxu0 0.0
          %360 = vmatprep.subr.mxu0 0.0
          %361 = vmatpush1.msra.mxu0 0.0
          %362 = vmatprep.subr.mxu0 0.0
          %363 = vmatpush1.msra.mxu0 0.0
          %364 = vmatprep.subr.mxu0 0.0
          %365 = vmatpush1.msra.mxu0 0.0
          %366 = vmatprep.subr.mxu0 0.0
          %367 = vmatpush1.msra.mxu0 0.0
          %368 = vmatprep.subr.mxu0 0.0
          %369 = vmatpush1.msra.mxu0 0.0
          %370 = vmatprep.subr.mxu0 0.0
          %371 = vmatpush1.msra.mxu0 0.0
          %372 = vmatprep.subr.mxu0 0.0
          %373 = vmatpush1.msra.mxu0 0.0
          %374 = vmatprep.subr.mxu0 0.0
          %375 = vmatpush1.msra.mxu0 0.0
          %376 = vmatprep.subr.mxu0 0.0
          %377 = vmatpush1.msra.mxu0 0.0
          %378 = vmatprep.subr.mxu0 0.0
          %379 = vmatpush1.msra.mxu0 0.0
          %380 = vmatprep.subr.mxu0 0.0
          %381 = vmatpush1.msra.mxu0 0.0
          %382 = vmatprep.subr.mxu0 0.0
          %383 = vmatpush1.msra.mxu0 0.0
          %384 = vmatprep.subr.mxu0 0.0
          %385 = vmatpush1.msra.mxu0 0.0
          %386 = vmatprep.subr.mxu0 0.0
          %387 = vmatpush1.msra.mxu0 0.0
          %388 = vmatprep.subr.mxu0 0.0
          %389 = vmatpush1.msra.mxu0 0.0
          %390 = vmatprep.subr.mxu0 0.0
          %391 = vmatpush1.msra.mxu0 0.0
          %392 = vmatprep.subr.mxu0 0.0
          %393 = vmatpush1.msra.mxu0 0.0
          %394 = vmatprep.subr.mxu0 0.0
          %395 = vmatpush1.msra.mxu0 0.0
          %396 = vmatprep.subr.mxu0 0.0
          %397 = vmatpush1.msra.mxu0 0.0
          %398 = vmatprep.subr.mxu0 0.0
          %399 = vmatpush1.msra.mxu0 0.0
          %400 = vmatprep.subr.mxu0 0.0
          %401 = vmatpush1.msra.mxu0 0.0
          %402 = vmatprep.subr.mxu0 0.0
          %403 = vmatpush1.msra.mxu0 0.0
          %404 = vmatprep.subr.mxu0 0.0
          %405 = vmatpush1.msra.mxu0 0.0
          %406 = vmatprep.subr.mxu0 0.0
          %407 = vmatpush1.msra.mxu0 0.0
          %408 = vmatprep.subr.mxu0 0.0
          %409 = vmatpush1.msra.mxu0 0.0
          %410 = vmatprep.subr.mxu0 0.0
          %411 = vmatpush1.msra.mxu0 0.0
          %412 = vmatprep.mubr.f32.mxu0 0.0
          %413 = vmatmul.mubr.f32.gmra.mrb[0].mxu0 %v342
          %v414 = vpop.f32.mrb[0].mxu0
          %v415 = vadd.f32 0.0, %v414
          %v416 = vpop.f32.mrb[0].mxu0
          %417 = vdwg.mxu0
          %s418 = sld [smem:[#allocation4]]
          %v419 = vstv %s418
          %v420 = vmul.f32 %v419, %v415
          %v421 = vadd.f32 %v420, %v338
          %422 = vst [vmem:[%s224] sm:$0xf] %v421
        $region48: #{tpu_custom_call.1} parent=27 // pred_fallthru
          _
        %s423 = sand.u32 %s101, 1
        %s424 = scalar_lea.sflag [#allocation7], %s423
        %s425 = sand.u32 %s101, 1
        %s426 = smul.addr %s425, 4
        %s427 = scalar_lea.vmem [#allocation8], %s426
        %s428 = sand.u32 %s131, 1
        %s429 = scalar_lea.sflag [#allocation10], %s428
        %s430 = sand.u32 %s131, 1
        %s431 = smul.addr %s430, 4
        %s432 = scalar_lea.vmem [#allocation9], %s431
        // Predicated region
        $region49: #{tpu_custom_call.1} parent=27 // pred_check
          %p433 = pneg %p111
        $region50: #{tpu_custom_call.1} parent=27 // pred_check_branch
          %435 = sbr.rel (%p433) target = $region52
        $region51: #{tpu_custom_call.1} parent=27 // pred_region
          %s437 = ssub.s32 64, 64
          %438 = vsyncadd %s424, %s437
          %s439 = smul.addr %s30, 64
          %s440 = scalar_lea.hbm %s2, %s439
          %s442 = sshll.u32 %s427, 4
          %s443 = int_to_ptr.vmem [resolvable:$true] %s442
          %445 = dma.vmem_to_hbm [thread:$0]  %s443, 64, %s440, %s424
        $region52: #{tpu_custom_call.1} parent=27 // pred_fallthru
          _
        // Predicated region
        $region53: #{tpu_custom_call.1} parent=27 // pred_check
          %p446 = pneg %p141
        $region54: #{tpu_custom_call.1} parent=27 // pred_check_branch
          %448 = sbr.rel (%p446) target = $region56
        $region55: #{tpu_custom_call.1} parent=27 // pred_region
          %s449 = smul.u32 %s32, %s31
          %s451 = ssub.s32 64, 64
          %452 = vsyncadd %s429, %s451
          %s453 = smul.addr %s30, 2
          %s454 = sadd.s32 %s449, %s453
          %s455 = smul.addr %s454, 64
          %s456 = scalar_lea.hbm %s3, %s455
          %s458 = sshll.u32 %s432, 4
          %s459 = int_to_ptr.vmem [resolvable:$true] %s458
          %461 = dma.vmem_to_hbm [thread:$0]  %s459, 64, %s456, %s429
        $region56: #{tpu_custom_call.1} parent=27 // pred_fallthru
          _
      $region28: #{tpu_custom_call.1} parent=5 // pred_fallthru
        _
      %p462 = scmp.le.s32.totalorder 2, %s20
      // Predicated region
      $region57: #{tpu_custom_call.1} parent=5 // pred_check
        %p463 = pneg %p462
      $region58: #{tpu_custom_call.1} parent=5 // pred_check_branch
        %465 = sbr.rel (%p463) target = $region60
      $region59: #{tpu_custom_call.1} parent=5 // pred_region
        %s466 = ssub.s32 %s20, 2
        // Predicated region
        $region61: #{tpu_custom_call.1} parent=59 // pred_check
          %p467 = pneg %p117
        $region62: #{tpu_custom_call.1} parent=59 // pred_check_branch
          %469 = sbr.rel (%p467) target = $region64
        $region63: #{tpu_custom_call.1} parent=59 // pred_region
          %s470 = sand.u32 %s102, 1
          %s471 = scalar_lea.sflag [#allocation7], %s470
          %s472 = sand.u32 %s102, 1
          %s473 = smul.addr %s472, 4
          %s474 = scalar_lea.vmem [#allocation8], %s473
          %475 = dma.done %s471, 64
        $region64: #{tpu_custom_call.1} parent=59 // pred_fallthru
          _
        // Predicated region
        $region65: #{tpu_custom_call.1} parent=59 // pred_check
          %p476 = pneg %p147
        $region66: #{tpu_custom_call.1} parent=59 // pred_check_branch
          %478 = sbr.rel (%p476) target = $region68
        $region67: #{tpu_custom_call.1} parent=59 // pred_region
          %s479 = sand.u32 %s132, 1
          %s480 = scalar_lea.sflag [#allocation10], %s479
          %s481 = sand.u32 %s132, 1
          %s482 = smul.addr %s481, 4
          %s483 = scalar_lea.vmem [#allocation9], %s482
          %484 = dma.done %s480, 64
        $region68: #{tpu_custom_call.1} parent=59 // pred_fallthru
          _
      $region60: #{tpu_custom_call.1} parent=5 // pred_fallthru
        _
    $region6: #{tpu_custom_call.1} parent=1 // loop_footer
      %s24 = sadd.s32 1, %s20
    $region7: #{tpu_custom_call.1} parent=1 // loop_footer_branch
      %19 = sbr.rel target = $region3
    $region8: #{tpu_custom_call.1} parent=1 // loop_exit
      _
    %485 = vsyncpa [#allocation6], 1
    %s486 = scalar_lea.sflag [#allocation6], 1
    %487 = vsyncpa %s486, 1
    %488 = vsyncpa [#allocation7], 1
    %s489 = scalar_lea.sflag [#allocation7], 1
    %490 = vsyncpa %s489, 1
    %491 = vsyncpa [#allocation10], 1
    %s492 = scalar_lea.sflag [#allocation10], 1
    %493 = vsyncpa %s492, 1

</llo_original>
